<compile_context>
chip_gen: v7x
topology: tpu7x:2x2x1
jax: 0.10.0
libtpu: 0.0.40
codegen_flags: <defaults>
</compile_context>

<pallas_src>
import jax
import jax.numpy as jnp
from jax.experimental import pallas as pl
from jax.experimental.pallas import tpu as pltpu


def _round_up(x: int, m: int) -> int:
    return (x + m - 1) // m * m


# ----------------------------------------------------------------------------
# Pallas kernel body: one broadcast multiply (outer product) per tile.
#   r2_ref      : (KK_pad, 1)         squared radius per grid position (sublanes)
#   inv_std_ref : (1, lane_tile)      reciprocal std per channel pair  (lanes)
#   out_ref     : (KK_pad, lane_tile) lane-dense, contiguous-in-HBM output tile
# ----------------------------------------------------------------------------
def _iso_quadratic_kernel(r2_ref, inv_std_ref, out_ref):
    out_ref[...] = r2_ref[...] * inv_std_ref[...]


def quadratic_kernel_iso2d(std_param, pos_grid, kernel_size, tile_oi=16384):
    """std_param: (O, I) float; pos_grid: (2, K*K). Returns (O, I, K, K) float32."""
    O, I = std_param.shape
    K = kernel_size
    KK = K * K
    KK_pad = _round_up(KK, 8)          # full-sublane vregs, rectangular DMA rows
    OI = O * I

    # Lane-dense tiling: OI on lanes, padded to a multiple of 128.  Pick the biggest
    # tile <= tile_oi; if a single tile would cover all of OI while OI spans >= 2
    # lane groups, split it so the "parallel" grid axis has >= 2 steps (v7x megacore).
    OI_lanes = _round_up(OI, 128)
    lane_tile = min(_round_up(tile_oi, 128), OI_lanes)
    if lane_tile == OI_lanes and OI_lanes >= 256:
        lane_tile = _round_up(OI_lanes // 2, 128)
    OI_pad = _round_up(OI, lane_tile)
    num_tiles = OI_pad // lane_tile

    # Tiny wrapper-side coefficient prep (exact math, negligible HBM traffic):
    #   r2[kk]      = y^2 + x^2 per grid position   -> sublane column (zero-padded)
    #   inv_std[oi] = 1 / std_param[o, i]           -> lane row       (zero-padded)
    r2 = jnp.sum(pos_grid.astype(jnp.float32) ** 2, axis=0).reshape(KK, 1)
    r2 = jnp.pad(r2, ((0, KK_pad - KK), (0, 0)))
    inv_std = (1.0 / std_param.astype(jnp.float32)).reshape(1, OI)
    inv_std = jnp.pad(inv_std, ((0, 0), (0, OI_pad - OI)))

    out_tiles = pl.pallas_call(
        _iso_quadratic_kernel,
        out_shape=jax.ShapeDtypeStruct((num_tiles, KK_pad, lane_tile), jnp.float32),
        grid=(num_tiles,),
        in_specs=[
            pl.BlockSpec((KK_pad, 1), lambda i: (0, 0)),       # r2: constant block (no re-fetch)
            pl.BlockSpec((1, lane_tile), lambda i: (0, i)),    # inv_std: lane tile i
        ],
        # Contiguous per-tile slab -> one long linear writeback DMA per grid step.
        out_specs=pl.BlockSpec((None, KK_pad, lane_tile), lambda i: (i, 0, 0)),
        compiler_params=pltpu.CompilerParams(
            dimension_semantics=("parallel",)),
    )(r2, inv_std)

    # Layout plumbing back to the PyTorch (O, I, K, K) convention.
    # TODO(synk): consume the lane-dense (KK, OI) layout directly in the tropical-conv
    # consumer (or fuse this kernel as its prologue) and drop this extra HBM pass.
    out = out_tiles[:, :KK, :]                     # drop KK padding rows (25..31)
    out = jnp.transpose(out, (0, 2, 1))            # (num_tiles, lane_tile, KK)
    out = out.reshape(num_tiles * lane_tile, KK)[:OI]
    return out.reshape(O, I, K, K)


# ----------------------------------------------------------------------------
# Deterministic parameter / buffer construction (stands in for nn.Parameter init
# and utils.make_pos_grid -- synthetic, no checkpoint load).
# ----------------------------------------------------------------------------
def make_pos_grid(kernel_size):
    """Centered offsets, shape (2, K*K), grid dimension at the end.
    Row 0 = row (y) offset, row 1 = column (x) offset, flattened row-major so the
    final reshape to (K, K) matches the PyTorch buffer convention."""
    K = kernel_size
    offs = jnp.arange(K, dtype=jnp.float32) - (K - 1) / 2.0
    yy, xx = jnp.meshgrid(offs, offs, indexing="ij")
    return jnp.stack([yy.reshape(-1), xx.reshape(-1)], axis=0)  # (2, K*K)


def init_std_param(key, in_channels, out_channels, init="normal"):
    """Matches QuadraticKernelIso2D.__init__: (O, I) parameter, 'zero' or 'normal'."""
    O, I = out_channels, in_channels
    if init == "zero":
        return jnp.zeros((O, I), jnp.float32)
    elif init == "normal":
        return jax.random.normal(key, (O, I), dtype=jnp.float32)
    else:
        raise ValueError(f"Invalid init={init!r}")


def reference_forward(std_param, pos_grid, kernel_size):
    """Pure-JAX reference matching the PyTorch forward exactly (division form)."""
    O, I = std_param.shape
    K = kernel_size
    r2 = jnp.sum(pos_grid ** 2, axis=-2)          # (K*K,)
    dists = r2 / std_param[:, :, None]            # (O, I, K*K)
    return dists.reshape(O, I, K, K)


if __name__ == "__main__":
    in_channels = 10
    out_channels = 20      # O*I = 200 -> 2 lane tiles of 128 (exercises grid + padding)
    kernel_size = 5        # K*K = 25 -> padded to 32 sublanes (sliced off in wrapper)

    key = jax.random.PRNGKey(0)
    # 'normal' init (the 'zero' init of the module divides by zero -> inf in both paths).
    std_param = init_std_param(key, in_channels, out_channels, init="normal")
    pos_grid = make_pos_grid(kernel_size)

    out = quadratic_kernel_iso2d(std_param, pos_grid, kernel_size)
    out = jax.block_until_ready(out)

    ref = reference_forward(std_param, pos_grid, kernel_size)
    assert out.shape == (out_channels, in_channels, kernel_size, kernel_size)
    assert jnp.allclose(out, ref, atol=1e-5, rtol=1e-5), (
        f"mismatch: max abs err {jnp.max(jnp.abs(out - ref))}")

    print("KERNEL_OK")
</pallas_src>

<mosaic_0001>
module attributes {stable_mosaic.version = 11 : i64} {
  func.func @_iso_quadratic_kernel(%arg0: i32, %arg1: memref<32x1xf32, #tpu.memory_space<vmem>>, %arg2: memref<1x128xf32, #tpu.memory_space<vmem>>, %arg3: memref<1x32x128xf32, #tpu.memory_space<vmem>>) attributes {dimension_semantics = [#tpu.dimension_semantics<parallel>], iteration_bounds = array<i64: 2>, scalar_prefetch = 0 : i64, scratch_operands = 0 : i64, tpu.core_type = #tpu.core_type<tc>, window_params = [{pipeline_mode = #tpu.pipeline_mode<synchronous>, transform_indices = @transform_0, window_bounds = array<i64: 32, 1>}, {transform_indices = @transform_1, window_bounds = array<i64: 1, 128>}, {transform_indices = @transform_2, window_bounds = array<i64: 1, 32, 128>}]} {
    %c0 = arith.constant 0 : index
    %c0_0 = arith.constant 0 : index
    %0 = vector.load %arg1[%c0, %c0_0] : memref<32x1xf32, #tpu.memory_space<vmem>>, vector<32x1xf32>
    %c0_1 = arith.constant 0 : index
    %c0_2 = arith.constant 0 : index
    %1 = vector.load %arg2[%c0_1, %c0_2] : memref<1x128xf32, #tpu.memory_space<vmem>>, vector<1x128xf32>
    %2 = vector.broadcast %0 : vector<32x1xf32> to vector<32x128xf32>
    %3 = vector.broadcast %1 : vector<1x128xf32> to vector<32x128xf32>
    %4 = arith.mulf %2, %3 : vector<32x128xf32>
    %c0_3 = arith.constant 0 : index
    %c0_4 = arith.constant 0 : index
    %c0_5 = arith.constant 0 : index
    %5 = vector.load %arg3[%c0_3, %c0_4, %c0_5] : memref<1x32x128xf32, #tpu.memory_space<vmem>>, vector<1x32x128xf32>
    %6 = vector.shape_cast %5 : vector<1x32x128xf32> to vector<32x128xf32>
    %7 = vector.shape_cast %4 : vector<32x128xf32> to vector<1x32x128xf32>
    tpu.vector_store %arg3[%c0_3, %c0_4, %c0_5], %7 {strides = array<i32>} : memref<1x32x128xf32, #tpu.memory_space<vmem>>, vector<1x32x128xf32>,
    return
  }
  func.func @transform_0(%arg0: i32) -> (i32, i32) {
    %c0_i32 = arith.constant 0 : i32
    %c0_i32_0 = arith.constant 0 : i32
    %c0_i32_1 = arith.constant 0 : i32
    return %c0_i32, %c0_i32_0 : i32, i32
  }
  func.func @transform_1(%arg0: i32) -> (i32, i32) {
    %c0_i32 = arith.constant 0 : i32
    %c0_i32_0 = arith.constant 0 : i32
    return %c0_i32, %arg0 : i32, i32
  }
  func.func @transform_2(%arg0: i32) -> (i32, i32, i32) {
    %c0_i32 = arith.constant 0 : i32
    %c0_i32_0 = arith.constant 0 : i32
    %c0_i32_1 = arith.constant 0 : i32
    return %arg0, %c0_i32, %c0_i32_0 : i32, i32, i32
  }
}

</mosaic_0001>

<llo_original>
// kernel: tpu_custom_call.1
$region0: #{tpu_custom_call.1}
  #allocation0 [shape = 'u32[]', space=smem, size = 0x4, offset = 0x4, fixed_abs, tag = 'smem constant byte address 0x4 - core index']
  #allocation1 [shape = 'u32[144,128]{1,0:T(1,128)}', space=vmem, size = 0x12000, scoped, tag = 'internal scratch']
  %s0 = inlined_call_operand.vmem [shape: f32[32,1], index: 0, kind: input, shape index: {}]
  %s1 = inlined_call_operand.vmem [shape: f32[1,256], index: 1, kind: input, shape index: {}]
  %s2 = inlined_call_operand.hbm [shape: f32[2,32,128], index: 2, kind: output, shape index: {}]
  %s3 = sld [smem:[#allocation0]]
  $region41: #{tpu_custom_call.1} parent=0
    _
  %s5 = ssub.s32 1, %s3
  %s6 = scalar_select 0, %s5, %s3
  $region1: #{tpu_custom_call.1} parent=0
    #allocation2 [shape = 'u8[32768]{0}', space=vmem, size = 0x8000, scoped, tag = 'output window, operand 0']
    #allocation3 [shape = 's32[2]{0}', space=sflag, size = 0x8, scoped, tag = 'scoped memory for tpu_custom_call.1']
    %7 = vsyncpa [#allocation3], 0
    %s8 = scalar_lea.sflag [#allocation3], 1
    %9 = vsyncpa %s8, 0
    loop: start=0, step=1, limit=4
    $region2: #{tpu_custom_call.1} parent=1 // loop_pre_header
      _
    $region3: #{tpu_custom_call.1} parent=1 // loop_header
      %s11 = sphi 0, %s15
      %p12 = scmp.ge.s32.totalorder %s11, 4
      %s19 = sphi 0, %s19
      %s21 = sphi 0, %s19
      %s22 = sphi 0, %s21
      %s36 = sphi 0, %s22
      %s42 = sphi 0, %s44
      %s45 = sphi 0, %s42
      %s46 = sphi 0, %s45
      %s62 = sphi 0, %s46
      %s68 = sphi 0, %s70
      %s71 = sphi 0, %s68
      %s72 = sphi 0, %s71
      %s88 = sphi 0, %s72
    $region4: #{tpu_custom_call.1} parent=1 // loop_header_branch
      %14 = sbr.rel (%p12) target = $region8
    $region5: #{tpu_custom_call.1} parent=1 // loop_body
      %s16 = ssub.s32 %s11, 1
      %s17 = ssub.s32 %s11, 2
      %s18 = sadd.s32 %s11, 1
      %s20 = sadd.s32 %s19, 1
      %p23 = scmp.eq.s32.totalorder %s11, 1
      %p24 = scmp.ne.s32.totalorder %s19, %s21
      %p25 = scmp.eq.s32.totalorder %s11, 0
      %p26 = por %p24, %p25
      %p27 = scmp.ne.s32.totalorder %s19, %s21
      %p28 = scmp.eq.s32.totalorder %s16, 1
      %p29 = por %p27, %p28
      %p30 = scmp.ne.s32.totalorder %s21, %s22
      %p31 = scmp.eq.s32.totalorder %s16, 0
      %p32 = por %p30, %p31
      %p33 = scmp.ne.s32.totalorder %s21, %s22
      %p34 = scmp.eq.s32.totalorder %s17, 1
      %p35 = por %p33, %p34
      %p37 = scmp.ne.s32.totalorder %s22, %s36
      %p38 = scmp.eq.s32.totalorder %s17, 0
      %p39 = por %p37, %p38
      %s40 = ssub.s32 %s11, %s18
      %p41 = scmp.eq.s32.totalorder %s40, 0
      %s43 = sadd.s32 %s42, 1
      %s44 = scalar_select %p41, %s42, %s43
      %p47 = pneg %p41
      %p48 = scmp.eq.s32.totalorder %s11, 1
      %p49 = por %p47, %p48
      %p50 = scmp.ne.s32.totalorder %s42, %s45
      %p51 = scmp.eq.s32.totalorder %s11, 0
      %p52 = por %p50, %p51
      %p53 = scmp.ne.s32.totalorder %s42, %s45
      %p54 = scmp.eq.s32.totalorder %s16, 1
      %p55 = por %p53, %p54
      %p56 = scmp.ne.s32.totalorder %s45, %s46
      %p57 = scmp.eq.s32.totalorder %s16, 0
      %p58 = por %p56, %p57
      %p59 = scmp.ne.s32.totalorder %s45, %s46
      %p60 = scmp.eq.s32.totalorder %s17, 1
      %p61 = por %p59, %p60
      %p63 = scmp.ne.s32.totalorder %s46, %s62
      %p64 = scmp.eq.s32.totalorder %s17, 0
      %p65 = por %p63, %p64
      %s66 = ssub.s32 %s11, %s18
      %p67 = scmp.eq.s32.totalorder %s66, 0
      %s69 = sadd.s32 %s68, 1
      %s70 = scalar_select %p67, %s68, %s69
      %p73 = pneg %p67
      %p74 = scmp.eq.s32.totalorder %s11, 1
      %p75 = por %p73, %p74
      %p76 = scmp.ne.s32.totalorder %s68, %s71
      %p77 = scmp.eq.s32.totalorder %s11, 0
      %p78 = por %p76, %p77
      %p79 = scmp.ne.s32.totalorder %s68, %s71
      %p80 = scmp.eq.s32.totalorder %s16, 1
      %p81 = por %p79, %p80
      %p82 = scmp.ne.s32.totalorder %s71, %s72
      %p83 = scmp.eq.s32.totalorder %s16, 0
      %p84 = por %p82, %p83
      %p85 = scmp.ne.s32.totalorder %s71, %s72
      %p86 = scmp.eq.s32.totalorder %s17, 1
      %p87 = por %p85, %p86
      %p89 = scmp.ne.s32.totalorder %s72, %s88
      %p90 = scmp.eq.s32.totalorder %s17, 0
      %p91 = por %p89, %p90
      %p92 = scmp.le.s32.totalorder 1, %s11
      %p93 = scmp.lt.s32.totalorder %s11, 3
      %p94 = pnand %p92, %p93
      %p95 = pneg %p94
      // Predicated region
      $region9: #{tpu_custom_call.1} parent=5 // pred_check
        _
      $region10: #{tpu_custom_call.1} parent=5 // pred_check_branch
        %97 = sbr.rel (%p94) target = $region12
      $region11: #{tpu_custom_call.1} parent=5 // pred_region
        %s98 = ssub.s32 %s11, 1
        // Predicated region
        $region13: #{tpu_custom_call.1} parent=11 // pred_check
          %p99 = pneg %p32
        $region14: #{tpu_custom_call.1} parent=11 // pred_check_branch
          %101 = sbr.rel (%p99) target = $region16
        $region15: #{tpu_custom_call.1} parent=11 // pred_region
          _
        $region16: #{tpu_custom_call.1} parent=11 // pred_fallthru
          _
      $region12: #{tpu_custom_call.1} parent=5 // pred_fallthru
        _
      %p102 = scmp.lt.s32.totalorder %s11, 2
      // Predicated region
      $region17: #{tpu_custom_call.1} parent=5 // pred_check
        %p103 = pneg %p102
      $region18: #{tpu_custom_call.1} parent=5 // pred_check_branch
        %105 = sbr.rel (%p103) target = $region20
      $region19: #{tpu_custom_call.1} parent=5 // pred_region
        // Predicated region
        $region21: #{tpu_custom_call.1} parent=19 // pred_check
          %p106 = pneg %p52
        $region22: #{tpu_custom_call.1} parent=19 // pred_check_branch
          %108 = sbr.rel (%p106) target = $region24
        $region23: #{tpu_custom_call.1} parent=19 // pred_region
          %p109 = scmp.lt.s32.totalorder %s11, 1
          %s110 = scalar_select %p109, %s11, 1
          %s111 = scalar_lea.vmem %s1, %s110
        $region24: #{tpu_custom_call.1} parent=19 // pred_fallthru
          _
      $region20: #{tpu_custom_call.1} parent=5 // pred_fallthru
        _
      %p112 = scmp.le.s32.totalorder 1, %s11
      %p113 = scmp.lt.s32.totalorder %s11, 3
      %p114 = pnand %p112, %p113
      %p115 = pneg %p114
      // Predicated region
      $region25: #{tpu_custom_call.1} parent=5 // pred_check
        _
      $region26: #{tpu_custom_call.1} parent=5 // pred_check_branch
        %117 = sbr.rel (%p114) target = $region28
      $region27: #{tpu_custom_call.1} parent=5 // pred_region
        %s118 = ssub.s32 %s11, 1
        %p119 = pneg %p32
        %p120 = pneg %p29
        %p121 = scmp.lt.s32.totalorder %s16, 1
        %s122 = scalar_select %p121, %s16, 1
        %s123 = scalar_lea.vmem %s1, %s122
        %p124 = pneg %p58
        %p125 = pneg %p55
        %p126 = pneg %p84
        %p127 = pneg %p81
        %s128 = sand.u32 %s71, 1
        %s129 = scalar_lea.sflag [#allocation3], %s128
        %s130 = sand.u32 %s71, 1
        %s131 = smul.addr %s130, 32
        %s132 = scalar_lea.vmem [#allocation2], %s131
        %p133 = scmp.lt.s32.totalorder %s16, 1
        %s134 = scalar_select %p133, %s16, 1
        %s135 = scalar_lea.vmem %s1, %s134
        %v136 = vld [vmem:[%s0] sm:$0xff]
        %v137 = vld [vmem:[%s0 + $0x8] sm:$0xff]
        %v138 = vld [vmem:[%s0 + $0x10] sm:$0xff]
        %v139 = vld [vmem:[%s0 + $0x18] sm:$0xff]
        %v140 = vld [vmem:[%s135] sm:$0x1]
        %142 = vset.pattern.permute.xlu0 0
        %143 = vperm.xlu0 %142, %v136
        %v144 = vpop.permute.xlu0 %143
        %147 = vset.pattern.permute.xlu0 0
        %148 = vperm.xlu0 %147, %v137
        %v149 = vpop.permute.xlu0 %148
        %152 = vset.pattern.permute.xlu0 0
        %153 = vperm.xlu0 %152, %v138
        %v154 = vpop.permute.xlu0 %153
        %157 = vset.pattern.permute.xlu0 0
        %158 = vperm.xlu0 %157, %v139
        %v159 = vpop.permute.xlu0 %158
        %v162 = vlaneseq
        %v163 = vshrl.u32 %v162, 7
        %v164 = vsub.s32 0, %v163
        %v165 = vrot.slane %v140, %v164
        %v167 = vmul.f32 %v144, %v165
        %v168 = vmul.f32 %v149, %v165
        %v169 = vmul.f32 %v154, %v165
        %v170 = vmul.f32 %v159, %v165
        %171 = vst [vmem:[%s132] sm:$0xff] %v167
        %172 = vst [vmem:[%s132 + $0x8] sm:$0xff] %v168
        %173 = vst [vmem:[%s132 + $0x10] sm:$0xff] %v169
        %174 = vst [vmem:[%s132 + $0x18] sm:$0xff] %v170
        %s175 = sand.u32 %s71, 1
        %s176 = scalar_lea.sflag [#allocation3], %s175
        %s177 = sand.u32 %s71, 1
        %s178 = smul.addr %s177, 32
        %s179 = scalar_lea.vmem [#allocation2], %s178
        // Predicated region
        $region29: #{tpu_custom_call.1} parent=27 // pred_check
          %p180 = pneg %p81
        $region30: #{tpu_custom_call.1} parent=27 // pred_check_branch
          %182 = sbr.rel (%p180) target = $region32
        $region31: #{tpu_custom_call.1} parent=27 // pred_region
          %s184 = ssub.s32 512, 512
          %185 = vsyncadd %s176, %s184
          %s186 = smul.addr %s16, 4
          %s187 = smul.addr %s186, 128
          %s188 = scalar_lea.hbm %s2, %s187
          %s189 = sshll.u32 %s179, 4
          %s190 = int_to_ptr.vmem [resolvable:$true] %s189
          %195 = dma.vmem_to_hbm [thread:$0]  %s190, 512, %s188, %s176, 128, 128, 8
        $region32: #{tpu_custom_call.1} parent=27 // pred_fallthru
          _
      $region28: #{tpu_custom_call.1} parent=5 // pred_fallthru
        _
      %p196 = scmp.le.s32.totalorder 2, %s11
      // Predicated region
      $region33: #{tpu_custom_call.1} parent=5 // pred_check
        %p197 = pneg %p196
      $region34: #{tpu_custom_call.1} parent=5 // pred_check_branch
        %199 = sbr.rel (%p197) target = $region36
      $region35: #{tpu_custom_call.1} parent=5 // pred_region
        %s200 = ssub.s32 %s11, 2
        // Predicated region
        $region37: #{tpu_custom_call.1} parent=35 // pred_check
          %p201 = pneg %p87
        $region38: #{tpu_custom_call.1} parent=35 // pred_check_branch
          %203 = sbr.rel (%p201) target = $region40
        $region39: #{tpu_custom_call.1} parent=35 // pred_region
          %s204 = sand.u32 %s72, 1
          %s205 = scalar_lea.sflag [#allocation3], %s204
          %s206 = sand.u32 %s72, 1
          %s207 = smul.addr %s206, 32
          %s208 = scalar_lea.vmem [#allocation2], %s207
          %209 = dma.done %s205, 512
        $region40: #{tpu_custom_call.1} parent=35 // pred_fallthru
          _
      $region36: #{tpu_custom_call.1} parent=5 // pred_fallthru
        _
    $region6: #{tpu_custom_call.1} parent=1 // loop_footer
      %s15 = sadd.s32 1, %s11
    $region7: #{tpu_custom_call.1} parent=1 // loop_footer_branch
      %10 = sbr.rel target = $region3
    $region8: #{tpu_custom_call.1} parent=1 // loop_exit
      _
    %210 = vsyncpa [#allocation3], 1
    %s211 = scalar_lea.sflag [#allocation3], 1
    %212 = vsyncpa %s211, 1

</llo_original>
